<compile_context>
chip_gen: v5e
topology: v5e:2x2
jax: 0.10.0
libtpu: 0.0.40
codegen_flags: <defaults>
</compile_context>

<pallas_src>
import functools

import jax
import jax.numpy as jnp
from jax.experimental import pallas as pl
from jax.experimental.pallas import tpu as pltpu


def _layernorm_kernel(x_ref, gamma_ref, beta_ref, o_ref, *, eps, d):
    # x_ref: (tm, D) VMEM tile; gamma_ref/beta_ref: (1,) SMEM scalars.
    x = x_ref[...].astype(jnp.float32)

    # One-pass statistics: s1 = sum(x), s2 = sum(x*x).
    s1 = jnp.sum(x, axis=-1, keepdims=True)            # (tm, 1)
    s2 = jnp.sum(x * x, axis=-1, keepdims=True)        # (tm, 1)
    mean = s1 * (1.0 / d)
    # torch.Tensor.std defaults to the unbiased estimator (divide by D-1).
    var = (s2 - s1 * mean) / (d - 1)
    var = jnp.maximum(var, 0.0)                        # guard tiny cancellation
    std = jnp.sqrt(var)

    g = gamma_ref[0]
    b = beta_ref[0]
    inv = g / (std + eps)                              # (tm, 1)
    o_ref[...] = ((x - mean) * inv + b).astype(o_ref.dtype)


def _pick_row_tile(m, d, itemsize, block_rows, vmem_budget_bytes):
    """Largest row tile that (a) respects sublane packing, (b) fits the VMEM
    budget with double-buffered in+out, (c) leaves >= 2 grid steps when
    possible (v7x dual TensorCore)."""
    # Sublane granularity: 8 rows for 4-byte dtypes, 16 for 2-byte, 32 for 1-byte.
    row_align = max(8, 32 // max(1, itemsize))
    # Double-buffered input + output blocks: 4 * tm * D * itemsize bytes.
    cap = max(row_align, vmem_budget_bytes // (4 * d * itemsize))
    tm = min(block_rows, m, cap)
    tm = max(row_align, (tm // row_align) * row_align)
    # Ensure at least 2 grid steps so both v7x TCs (and pipelining) get work.
    while pl.cdiv(m, tm) < 2 and tm > row_align:
        tm = max(row_align, ((tm // 2) // row_align) * row_align)
    return tm


def layer_norm_pallas(x, gamma, beta, *, eps=1e-6, block_rows=2048,
                      vmem_budget_bytes=8 * 1024 * 1024):
    """LayerNormalization(x) with scalar gamma/beta, matching the PyTorch spec."""
    B, S, D = x.shape
    M = B * S
    x2d = x.reshape(M, D)                              # rows on sublanes, D on lanes

    itemsize = jnp.dtype(x.dtype).itemsize
    tm = _pick_row_tile(M, D, itemsize, block_rows, vmem_budget_bytes)
    grid = (pl.cdiv(M, tm),)                           # ragged edge handled by Pallas

    gamma_s = jnp.asarray(gamma, jnp.float32).reshape(1)
    beta_s = jnp.asarray(beta, jnp.float32).reshape(1)

    cost = pl.CostEstimate(
        flops=8 * M * D,                 # sums, center, scale, add, ...
        transcendentals=M,               # one sqrt per row
        bytes_accessed=2 * M * D * itemsize,
    )

    out2d = pl.pallas_call(
        functools.partial(_layernorm_kernel, eps=eps, d=D),
        out_shape=jax.ShapeDtypeStruct((M, D), x.dtype),
        grid_spec=pltpu.PrefetchScalarGridSpec(
            num_scalar_prefetch=0,
            grid=grid,
            in_specs=[
                pl.BlockSpec((tm, D), lambda i: (i, 0)),                 # x rows
                pl.BlockSpec(memory_space=pltpu.MemorySpace.SMEM),       # gamma (1,)
                pl.BlockSpec(memory_space=pltpu.MemorySpace.SMEM),       # beta  (1,)
            ],
            out_specs=pl.BlockSpec((tm, D), lambda i: (i, 0)),
        ),
        compiler_params=pltpu.CompilerParams(
            dimension_semantics=("parallel",),
            vmem_limit_bytes=32 * 1024 * 1024,
        ),
        cost_estimate=cost,
    )(x2d, gamma_s, beta_s)

    return out2d.reshape(B, S, D)


def encoder_forward(x, mask, gamma, beta, layers=(), eps=1e-6):
    """Encoder.forward: x -> layer(x, mask) for each layer -> LayerNormalization.

    `layers` is a sequence of plain-JAX callables (x, mask) -> x, since the
    spec's nn.ModuleList contents are not defined.
    """
    # TODO(synk): no concrete encoder-layer implementation is given in the spec,
    # so the layer stack cannot be lowered; only the final LayerNormalization
    # runs as a Pallas kernel (long term, fuse the LN into the last layer's
    # epilogue to save a full HBM round trip).
    for layer in layers:
        x = layer(x, mask)
    return layer_norm_pallas(x, gamma, beta, eps=eps)


def _reference_layernorm(x, gamma, beta, eps):
    # Pure-JAX reference, matching PyTorch exactly (unbiased std, /(std+eps)).
    d = x.shape[-1]
    mean = x.mean(-1, keepdims=True)
    var = jnp.sum((x - mean) ** 2, axis=-1, keepdims=True) / (d - 1)
    std = jnp.sqrt(var)
    return gamma[0] * (x - mean) / (std + eps) + beta[0]


if __name__ == "__main__":
    eps = 1e-6
    key = jax.random.PRNGKey(0)
    gamma = jnp.ones((1,), jnp.float32)     # nn.Parameter(torch.ones(1))
    beta = jnp.zeros((1,), jnp.float32)     # nn.Parameter(torch.zeros(1))

    # Case 1: lane-dense d_model, M a multiple of the sublane granularity.
    batch, seq_len, d_model = 2, 8, 128
    k1, k2 = jax.random.split(key)
    x = jax.random.normal(k1, (batch, seq_len, d_model), jnp.float32)
    mask = jnp.ones((batch, 1, seq_len, seq_len), jnp.float32)   # unused (no layers)

    out = encoder_forward(x, mask, gamma, beta, layers=(), eps=eps)
    out = jax.block_until_ready(out)
    ref = _reference_layernorm(x, gamma, beta, eps)
    assert out.shape == x.shape
    assert jnp.allclose(out, ref, atol=1e-5, rtol=1e-5), \
        float(jnp.max(jnp.abs(out - ref)))

    # Case 2: ragged row count (M = 21) to exercise the cdiv edge block.
    batch2, seq_len2 = 3, 7
    x2 = jax.random.normal(k2, (batch2, seq_len2, d_model), jnp.float32)
    mask2 = jnp.ones((batch2, 1, seq_len2, seq_len2), jnp.float32)
    out2 = encoder_forward(x2, mask2, gamma, beta, layers=(), eps=eps)
    out2 = jax.block_until_ready(out2)
    ref2 = _reference_layernorm(x2, gamma, beta, eps)
    assert out2.shape == x2.shape
    assert jnp.allclose(out2, ref2, atol=1e-5, rtol=1e-5), \
        float(jnp.max(jnp.abs(out2 - ref2)))

    print("KERNEL_OK")
</pallas_src>

<mosaic_0001>
module attributes {stable_mosaic.version = 11 : i64} {
  func.func @_layernorm_kernel(%arg0: i32, %arg1: memref<8x128xf32, #tpu.memory_space<vmem>>, %arg2: memref<1xf32, #tpu.memory_space<smem>>, %arg3: memref<1xf32, #tpu.memory_space<smem>>, %arg4: memref<8x128xf32, #tpu.memory_space<vmem>>) attributes {dimension_semantics = [#tpu.dimension_semantics<parallel>], iteration_bounds = array<i64: 2>, scalar_prefetch = 0 : i64, scratch_operands = 0 : i64, tpu.core_type = #tpu.core_type<tc>, window_params = [{transform_indices = @transform_0, window_bounds = array<i64: 8, 128>}, {transform_indices = @transform_1, window_bounds = array<i64: 1>}, {transform_indices = @transform_2, window_bounds = array<i64: 1>}, {transform_indices = @transform_3, window_bounds = array<i64: 8, 128>}]} {
    %c0 = arith.constant 0 : index
    %c0_0 = arith.constant 0 : index
    %0 = vector.load %arg1[%c0, %c0_0] : memref<8x128xf32, #tpu.memory_space<vmem>>, vector<8x128xf32>
    %cst = arith.constant dense<0.000000e+00> : vector<8xf32>
    %1 = vector.multi_reduction <add>, %0, %cst [1] : vector<8x128xf32> to vector<8xf32>
    %2 = vector.shape_cast %1 : vector<8xf32> to vector<8x1xf32>
    %3 = arith.mulf %0, %0 : vector<8x128xf32>
    %cst_1 = arith.constant dense<0.000000e+00> : vector<8xf32>
    %4 = vector.multi_reduction <add>, %3, %cst_1 [1] : vector<8x128xf32> to vector<8xf32>
    %5 = vector.shape_cast %4 : vector<8xf32> to vector<8x1xf32>
    %cst_2 = arith.constant 7.812500e-03 : f32
    %6 = vector.broadcast %cst_2 : f32 to vector<8x1xf32>
    %7 = arith.mulf %2, %6 : vector<8x1xf32>
    %8 = arith.mulf %2, %7 : vector<8x1xf32>
    %9 = arith.subf %5, %8 : vector<8x1xf32>
    %cst_3 = arith.constant 1.270000e+02 : f32
    %10 = vector.broadcast %cst_3 : f32 to vector<8x1xf32>
    %11 = arith.divf %9, %10 : vector<8x1xf32>
    %cst_4 = arith.constant 0.000000e+00 : f32
    %12 = vector.broadcast %cst_4 : f32 to vector<8x1xf32>
    %13 = arith.maximumf %11, %12 : vector<8x1xf32>
    %14 = math.sqrt %13 : vector<8x1xf32>
    %c0_5 = arith.constant 0 : index
    %15 = memref.load %arg2[%c0_5] : memref<1xf32, #tpu.memory_space<smem>>
    %c0_6 = arith.constant 0 : index
    %16 = memref.load %arg3[%c0_6] : memref<1xf32, #tpu.memory_space<smem>>
    %cst_7 = arith.constant 9.99999997E-7 : f32
    %17 = vector.broadcast %cst_7 : f32 to vector<8x1xf32>
    %18 = arith.addf %14, %17 : vector<8x1xf32>
    %19 = vector.broadcast %15 : f32 to vector<8x1xf32>
    %20 = arith.divf %19, %18 : vector<8x1xf32>
    %21 = vector.broadcast %7 : vector<8x1xf32> to vector<8x128xf32>
    %22 = arith.subf %0, %21 : vector<8x128xf32>
    %23 = vector.broadcast %20 : vector<8x1xf32> to vector<8x128xf32>
    %24 = arith.mulf %22, %23 : vector<8x128xf32>
    %25 = vector.broadcast %16 : f32 to vector<8x128xf32>
    %26 = arith.addf %24, %25 : vector<8x128xf32>
    %c0_8 = arith.constant 0 : index
    %c0_9 = arith.constant 0 : index
    %27 = vector.load %arg4[%c0_8, %c0_9] : memref<8x128xf32, #tpu.memory_space<vmem>>, vector<8x128xf32>
    tpu.vector_store %arg4[%c0_8, %c0_9], %26 {strides = array<i32>} : memref<8x128xf32, #tpu.memory_space<vmem>>, vector<8x128xf32>,
    return
  }
  func.func @transform_0(%arg0: i32) -> (i32, i32) {
    %c0_i32 = arith.constant 0 : i32
    %c0_i32_0 = arith.constant 0 : i32
    return %arg0, %c0_i32 : i32, i32
  }
  func.func @transform_1(%arg0: i32) -> i32 {
    %c0_i32 = arith.constant 0 : i32
    %c0_i32_0 = arith.constant 0 : i32
    return %c0_i32 : i32
  }
  func.func @transform_2(%arg0: i32) -> i32 {
    %c0_i32 = arith.constant 0 : i32
    %c0_i32_0 = arith.constant 0 : i32
    return %c0_i32 : i32
  }
  func.func @transform_3(%arg0: i32) -> (i32, i32) {
    %c0_i32 = arith.constant 0 : i32
    %c0_i32_0 = arith.constant 0 : i32
    return %arg0, %c0_i32 : i32, i32
  }
}

</mosaic_0001>

<llo_original>
// kernel: tpu_custom_call.1
$region0: #{tpu_custom_call.1}
  #allocation0 [shape = 'u32[]', space=smem, size = 0x4, offset = 0x4, fixed_abs, tag = 'smem constant byte address 0x4 - core index']
  #allocation1 [shape = 'u32[72,128]{1,0:T(1,128)}', space=vmem, size = 0x9000, scoped, tag = 'internal scratch']
  #allocation2 [shape = 'f32[1]{0:T(128)S(6)}', space=smem, size = 0x200, scoped, tag = 'scoped memory for tpu_custom_call.1']
  #allocation3 [shape = 'f32[1]{0:T(128)S(6)}', space=smem, size = 0x200, scoped, tag = 'scoped memory for tpu_custom_call.1']
  %s0 = inlined_call_operand.hbm [shape: f32[16,128], index: 0, kind: input, shape index: {}]
  %s1 = inlined_call_operand.<no memory space> [shape: f32[1], index: 1, kind: input, shape index: {}]
  %s2 = inlined_call_operand.<no memory space> [shape: f32[1], index: 2, kind: input, shape index: {}]
  %s3 = inlined_call_operand.hbm [shape: f32[16,128], index: 3, kind: output, shape index: {}]
  %s4 = sld [smem:[#allocation0]]
  $region49: #{tpu_custom_call.1} parent=0
    _
  %s6 = ssub.s32 1, %s4
  %s7 = scalar_select 0, %s6, %s4
  %8 = sst [smem:[#allocation2]] %s1
  %9 = sst [smem:[#allocation3]] %s2
  $region1: #{tpu_custom_call.1} parent=0
    #allocation4 [shape = 'u8[8192]{0}', space=vmem, size = 0x2000, scoped, tag = 'input window, operand 0']
    #allocation5 [shape = 's32[2]{0}', space=sflag, size = 0x8, scoped, tag = 'scoped memory for tpu_custom_call.1']
    #allocation6 [shape = 's32[2]{0}', space=sflag, size = 0x8, scoped, tag = 'scoped memory for tpu_custom_call.1']
    #allocation7 [shape = 'u8[8192]{0}', space=vmem, size = 0x2000, scoped, tag = 'output window, operand 0']
    %10 = vsyncpa [#allocation5], 0
    %s11 = scalar_lea.sflag [#allocation5], 1
    %12 = vsyncpa %s11, 0
    %13 = vsyncpa [#allocation6], 0
    %s14 = scalar_lea.sflag [#allocation6], 1
    %15 = vsyncpa %s14, 0
    loop: start=0, step=1, limit=4
    $region2: #{tpu_custom_call.1} parent=1 // loop_pre_header
      _
    $region3: #{tpu_custom_call.1} parent=1 // loop_header
      %s17 = sphi 0, %s21
      %p18 = scmp.ge.s32.totalorder %s17, 4
      %s27 = sphi 0, %s29
      %s30 = sphi 0, %s27
      %s31 = sphi 0, %s30
      %s47 = sphi 0, %s31
      %s51 = sphi 0, %s51
      %s53 = sphi 0, %s51
      %s54 = sphi 0, %s53
      %s68 = sphi 0, %s54
      %s72 = sphi 0, %s72
      %s74 = sphi 0, %s72
      %s75 = sphi 0, %s74
      %s89 = sphi 0, %s75
      %s95 = sphi 0, %s97
      %s98 = sphi 0, %s95
      %s99 = sphi 0, %s98
      %s115 = sphi 0, %s99
    $region4: #{tpu_custom_call.1} parent=1 // loop_header_branch
      %20 = sbr.rel (%p18) target = $region8
    $region5: #{tpu_custom_call.1} parent=1 // loop_body
      %s22 = ssub.s32 %s17, 1
      %s23 = ssub.s32 %s17, 2
      %s24 = sadd.s32 %s17, 1
      %s25 = ssub.s32 %s17, %s24
      %p26 = scmp.eq.s32.totalorder %s25, 0
      %s28 = sadd.s32 %s27, 1
      %s29 = scalar_select %p26, %s27, %s28
      %p32 = pneg %p26
      %p33 = scmp.eq.s32.totalorder %s17, 1
      %p34 = por %p32, %p33
      %p35 = scmp.ne.s32.totalorder %s27, %s30
      %p36 = scmp.eq.s32.totalorder %s17, 0
      %p37 = por %p35, %p36
      %p38 = scmp.ne.s32.totalorder %s27, %s30
      %p39 = scmp.eq.s32.totalorder %s22, 1
      %p40 = por %p38, %p39
      %p41 = scmp.ne.s32.totalorder %s30, %s31
      %p42 = scmp.eq.s32.totalorder %s22, 0
      %p43 = por %p41, %p42
      %p44 = scmp.ne.s32.totalorder %s30, %s31
      %p45 = scmp.eq.s32.totalorder %s23, 1
      %p46 = por %p44, %p45
      %p48 = scmp.ne.s32.totalorder %s31, %s47
      %p49 = scmp.eq.s32.totalorder %s23, 0
      %p50 = por %p48, %p49
      %s52 = sadd.s32 %s51, 1
      %p55 = scmp.eq.s32.totalorder %s17, 1
      %p56 = scmp.ne.s32.totalorder %s51, %s53
      %p57 = scmp.eq.s32.totalorder %s17, 0
      %p58 = por %p56, %p57
      %p59 = scmp.ne.s32.totalorder %s51, %s53
      %p60 = scmp.eq.s32.totalorder %s22, 1
      %p61 = por %p59, %p60
      %p62 = scmp.ne.s32.totalorder %s53, %s54
      %p63 = scmp.eq.s32.totalorder %s22, 0
      %p64 = por %p62, %p63
      %p65 = scmp.ne.s32.totalorder %s53, %s54
      %p66 = scmp.eq.s32.totalorder %s23, 1
      %p67 = por %p65, %p66
      %p69 = scmp.ne.s32.totalorder %s54, %s68
      %p70 = scmp.eq.s32.totalorder %s23, 0
      %p71 = por %p69, %p70
      %s73 = sadd.s32 %s72, 1
      %p76 = scmp.eq.s32.totalorder %s17, 1
      %p77 = scmp.ne.s32.totalorder %s72, %s74
      %p78 = scmp.eq.s32.totalorder %s17, 0
      %p79 = por %p77, %p78
      %p80 = scmp.ne.s32.totalorder %s72, %s74
      %p81 = scmp.eq.s32.totalorder %s22, 1
      %p82 = por %p80, %p81
      %p83 = scmp.ne.s32.totalorder %s74, %s75
      %p84 = scmp.eq.s32.totalorder %s22, 0
      %p85 = por %p83, %p84
      %p86 = scmp.ne.s32.totalorder %s74, %s75
      %p87 = scmp.eq.s32.totalorder %s23, 1
      %p88 = por %p86, %p87
      %p90 = scmp.ne.s32.totalorder %s75, %s89
      %p91 = scmp.eq.s32.totalorder %s23, 0
      %p92 = por %p90, %p91
      %s93 = ssub.s32 %s17, %s24
      %p94 = scmp.eq.s32.totalorder %s93, 0
      %s96 = sadd.s32 %s95, 1
      %s97 = scalar_select %p94, %s95, %s96
      %p100 = pneg %p94
      %p101 = scmp.eq.s32.totalorder %s17, 1
      %p102 = por %p100, %p101
      %p103 = scmp.ne.s32.totalorder %s95, %s98
      %p104 = scmp.eq.s32.totalorder %s17, 0
      %p105 = por %p103, %p104
      %p106 = scmp.ne.s32.totalorder %s95, %s98
      %p107 = scmp.eq.s32.totalorder %s22, 1
      %p108 = por %p106, %p107
      %p109 = scmp.ne.s32.totalorder %s98, %s99
      %p110 = scmp.eq.s32.totalorder %s22, 0
      %p111 = por %p109, %p110
      %p112 = scmp.ne.s32.totalorder %s98, %s99
      %p113 = scmp.eq.s32.totalorder %s23, 1
      %p114 = por %p112, %p113
      %p116 = scmp.ne.s32.totalorder %s99, %s115
      %p117 = scmp.eq.s32.totalorder %s23, 0
      %p118 = por %p116, %p117
      %p119 = scmp.le.s32.totalorder 1, %s17
      %p120 = scmp.lt.s32.totalorder %s17, 3
      %p121 = pnand %p119, %p120
      %p122 = pneg %p121
      // Predicated region
      $region9: #{tpu_custom_call.1} parent=5 // pred_check
        _
      $region10: #{tpu_custom_call.1} parent=5 // pred_check_branch
        %124 = sbr.rel (%p121) target = $region12
      $region11: #{tpu_custom_call.1} parent=5 // pred_region
        %s125 = ssub.s32 %s17, 1
        // Predicated region
        $region13: #{tpu_custom_call.1} parent=11 // pred_check
          %p126 = pneg %p64
        $region14: #{tpu_custom_call.1} parent=11 // pred_check_branch
          %128 = sbr.rel (%p126) target = $region16
        $region15: #{tpu_custom_call.1} parent=11 // pred_region
          _
        $region16: #{tpu_custom_call.1} parent=11 // pred_fallthru
          _
        // Predicated region
        $region17: #{tpu_custom_call.1} parent=11 // pred_check
          %p129 = pneg %p85
        $region18: #{tpu_custom_call.1} parent=11 // pred_check_branch
          %131 = sbr.rel (%p129) target = $region20
        $region19: #{tpu_custom_call.1} parent=11 // pred_region
          _
        $region20: #{tpu_custom_call.1} parent=11 // pred_fallthru
          _
      $region12: #{tpu_custom_call.1} parent=5 // pred_fallthru
        _
      %p132 = scmp.lt.s32.totalorder %s17, 2
      // Predicated region
      $region21: #{tpu_custom_call.1} parent=5 // pred_check
        %p133 = pneg %p132
      $region22: #{tpu_custom_call.1} parent=5 // pred_check_branch
        %135 = sbr.rel (%p133) target = $region24
      $region23: #{tpu_custom_call.1} parent=5 // pred_region
        // Predicated region
        $region25: #{tpu_custom_call.1} parent=23 // pred_check
          %p136 = pneg %p37
        $region26: #{tpu_custom_call.1} parent=23 // pred_check_branch
          %138 = sbr.rel (%p136) target = $region28
        $region27: #{tpu_custom_call.1} parent=23 // pred_region
          %s139 = sand.u32 %s27, 1
          %s140 = scalar_lea.sflag [#allocation5], %s139
          %s141 = sand.u32 %s27, 1
          %s142 = smul.addr %s141, 8
          %s143 = scalar_lea.vmem [#allocation4], %s142
          %145 = vsyncadd %s140, 0
          %s146 = smul.addr %s17, 8
          %s147 = scalar_lea.hbm %s0, %s146
          %s149 = sshll.u32 %s147, 4
          %s150 = int_to_ptr.hbm [resolvable:$true] %s149
          %s151 = sshll.u32 %s143, 4
          %s152 = int_to_ptr.vmem [resolvable:$true] %s151
          %154 = dma.hbm_to_vmem [thread:$0]  %s150, 128, %s152, %s140
        $region28: #{tpu_custom_call.1} parent=23 // pred_fallthru
          _
      $region24: #{tpu_custom_call.1} parent=5 // pred_fallthru
        _
      %p155 = scmp.le.s32.totalorder 1, %s17
      %p156 = scmp.lt.s32.totalorder %s17, 3
      %p157 = pnand %p155, %p156
      %p158 = pneg %p157
      // Predicated region
      $region29: #{tpu_custom_call.1} parent=5 // pred_check
        _
      $region30: #{tpu_custom_call.1} parent=5 // pred_check_branch
        %160 = sbr.rel (%p157) target = $region32
      $region31: #{tpu_custom_call.1} parent=5 // pred_region
        %s161 = ssub.s32 %s17, 1
        %s162 = sand.u32 %s30, 1
        %s163 = scalar_lea.sflag [#allocation5], %s162
        %s164 = sand.u32 %s30, 1
        %s165 = smul.addr %s164, 8
        %s166 = scalar_lea.vmem [#allocation4], %s165
        // Predicated region
        $region33: #{tpu_custom_call.1} parent=31 // pred_check
          %p167 = pneg %p43
        $region34: #{tpu_custom_call.1} parent=31 // pred_check_branch
          %169 = sbr.rel (%p167) target = $region36
        $region35: #{tpu_custom_call.1} parent=31 // pred_region
          %171 = dma.done %s163, 128
        $region36: #{tpu_custom_call.1} parent=31 // pred_fallthru
          _
        %s172 = sand.u32 %s30, 1
        %s173 = scalar_lea.sflag [#allocation5], %s172
        %s174 = sand.u32 %s30, 1
        %s175 = smul.addr %s174, 8
        %s176 = scalar_lea.vmem [#allocation4], %s175
        %p177 = pneg %p43
        %p178 = pneg %p40
        %p179 = pneg %p64
        %p180 = pneg %p61
        %p181 = pneg %p85
        %p182 = pneg %p82
        %p183 = pneg %p111
        %p184 = pneg %p108
        %s185 = sand.u32 %s98, 1
        %s186 = scalar_lea.sflag [#allocation6], %s185
        %s187 = sand.u32 %s98, 1
        %s188 = smul.addr %s187, 8
        %s189 = scalar_lea.vmem [#allocation7], %s188
        %v190 = vld [vmem:[%s166] sm:$0xff]
        %191 = vadd.xlane.f32.xlu0 %v190
        %v192 = vpop.xlane.xlu0 %191
        %v193 = vmul.f32 %v190, %v190
        %194 = vadd.xlane.f32.xlu0 %v193
        %v195 = vpop.xlane.xlu0 %194
        %v196 = vmul.f32 %v192, 0.0078125
        %v197 = vmul.f32 %v192, %v196
        %v198 = vsub.f32 %v195, %v197
        %v199 = vrcp.pop 127.0
        %v200 = vmul.f32 127.0, %v199
        %v201 = vsub.f32 1.0, %v200
        %v202 = vmul.f32 %v199, %v201
        %v203 = vadd.f32 %v199, %v202
        %vm204 = vweird.f32 %v199
        %v205 = vsel %vm204, %v199, %v203
        %v206 = vmul.f32 %v198, %v205
        %v207 = vmax.f32 %v206, 0.0
        %v208 = vrsqrt.pop %v207
        %v209 = vmul.f32 %v208, %v207
        %v210 = vmul.f32 %v209, %v208
        %v211 = vmul.f32 0.5, %v210
        %v212 = vsub.f32 1.5, %v211
        %v213 = vmul.f32 %v208, %v212
        %v214 = vmul.f32 %v207, %v213
        %vm215 = vcmp.eq.f32.partialorder %v207, inf
        %v216 = vsel %vm215, %v207, %v214
        %vm217 = vcmp.eq.f32.partialorder %v207, 0.0
        %v218 = vand.u32 %v207, 2147483648
        %v219 = vsel %vm217, %v218, %v216
        %s220 = sld [smem:[#allocation2]]
        %s221 = sld [smem:[#allocation3]]
        %v222 = vadd.f32 %v219, 1e-06
        %v223 = vstv %s220
        %v224 = vrcp.pop %v222
        %v225 = vmul.f32 %v222, %v224
        %v226 = vsub.f32 1.0, %v225
        %v227 = vmul.f32 %v224, %v226
        %v228 = vadd.f32 %v224, %v227
        %vm229 = vweird.f32 %v222
        %vm230 = vweird.f32 %v224
        %vm231 = vmor %vm229, %vm230
        %v232 = vsel %vm231, %v224, %v228
        %v233 = vand.u32 2147483647, %v222
        %vm234 = vcmp.eq.f32.partialorder %v233, 8.507059e+37
        %v235 = vand.u32 %v222, 2147483648
        %v236 = vor.u32 1.1754944e-38, %v235
        %v237 = vsel %vm234, %v236, %v232
        %v238 = vmul.f32 %v223, %v237
        %v239 = vsub.f32 %v190, %v196
        %v240 = vmul.f32 %v239, %v238
        %v241 = vstv %s221
        %v242 = vadd.f32 %v240, %v241
        %243 = vst [vmem:[%s189] sm:$0xff] %v242
        %s244 = sand.u32 %s98, 1
        %s245 = scalar_lea.sflag [#allocation6], %s244
        %s246 = sand.u32 %s98, 1
        %s247 = smul.addr %s246, 8
        %s248 = scalar_lea.vmem [#allocation7], %s247
        // Predicated region
        $region37: #{tpu_custom_call.1} parent=31 // pred_check
          %p249 = pneg %p108
        $region38: #{tpu_custom_call.1} parent=31 // pred_check_branch
          %251 = sbr.rel (%p249) target = $region40
        $region39: #{tpu_custom_call.1} parent=31 // pred_region
          %253 = vsyncadd %s245, 0
          %s254 = smul.addr %s22, 8
          %s255 = scalar_lea.hbm %s3, %s254
          %s257 = sshll.u32 %s248, 4
          %s258 = int_to_ptr.vmem [resolvable:$true] %s257
          %s259 = sshll.u32 %s255, 4
          %s260 = int_to_ptr.hbm [resolvable:$true] %s259
          %262 = dma.vmem_to_hbm [thread:$0]  %s258, 128, %s260, %s245
        $region40: #{tpu_custom_call.1} parent=31 // pred_fallthru
          _
      $region32: #{tpu_custom_call.1} parent=5 // pred_fallthru
        _
      %p263 = scmp.le.s32.totalorder 2, %s17
      // Predicated region
      $region41: #{tpu_custom_call.1} parent=5 // pred_check
        %p264 = pneg %p263
      $region42: #{tpu_custom_call.1} parent=5 // pred_check_branch
        %266 = sbr.rel (%p264) target = $region44
      $region43: #{tpu_custom_call.1} parent=5 // pred_region
        %s267 = ssub.s32 %s17, 2
        // Predicated region
        $region45: #{tpu_custom_call.1} parent=43 // pred_check
          %p268 = pneg %p114
        $region46: #{tpu_custom_call.1} parent=43 // pred_check_branch
          %270 = sbr.rel (%p268) target = $region48
        $region47: #{tpu_custom_call.1} parent=43 // pred_region
          %s271 = sand.u32 %s99, 1
          %s272 = scalar_lea.sflag [#allocation6], %s271
          %s273 = sand.u32 %s99, 1
          %s274 = smul.addr %s273, 8
          %s275 = scalar_lea.vmem [#allocation7], %s274
          %277 = dma.done %s272, 128
        $region48: #{tpu_custom_call.1} parent=43 // pred_fallthru
          _
      $region44: #{tpu_custom_call.1} parent=5 // pred_fallthru
        _
    $region6: #{tpu_custom_call.1} parent=1 // loop_footer
      %s21 = sadd.s32 1, %s17
    $region7: #{tpu_custom_call.1} parent=1 // loop_footer_branch
      %16 = sbr.rel target = $region3
    $region8: #{tpu_custom_call.1} parent=1 // loop_exit
      _
    %278 = vsyncpa [#allocation5], 1
    %s279 = scalar_lea.sflag [#allocation5], 1
    %280 = vsyncpa %s279, 1
    %281 = vsyncpa [#allocation6], 1
    %s282 = scalar_lea.sflag [#allocation6], 1
    %283 = vsyncpa %s282, 1

</llo_original>
